<compile_context>
chip_gen: v7x
topology: tpu7x:2x2x1
jax: 0.10.0
libtpu: 0.0.40
codegen_flags: <defaults>
</compile_context>

<pallas_src>
import functools

import numpy as np
import jax
import jax.numpy as jnp
from jax.experimental import pallas as pl
from jax.experimental.pallas import tpu as pltpu


def _num_triu(seq_len: int, diagonal_offset: int) -> int:
    """Number of (i, j) with j >= i + diagonal_offset (torch.triu_indices)."""
    return sum(
        max(0, seq_len - max(0, i + diagonal_offset)) for i in range(seq_len)
    )


def _vmem_capacity_bytes(default: int = 64 << 20) -> int:
    """Physical VMEM per core; conservative 64 MiB fallback (v7x-sized)."""
    try:
        info = pltpu.get_tpu_info()
        for attr in ("vmem_capacity_bytes", "vmem_bytes", "vmem_size_bytes"):
            v = getattr(info, attr, None)
            if v:
                return int(v)
    except Exception:
        pass
    return default


def _sublane_multiple(dtype) -> int:
    """Native sublane packing: 8 for 32-bit, 16 for bf16, 32 for int8/fp8."""
    itemsize = jnp.dtype(dtype).itemsize
    return max(8, 32 // max(1, itemsize))


def _choose_channel_tile(B, C, L, n_out, dtype, budget_bytes, target_steps=4):
    """Largest channel tile whose double-buffered in+out blocks fit the budget."""
    itemsize = jnp.dtype(dtype).itemsize
    sub = _sublane_multiple(dtype)
    per_channel = 2 * (L * L + n_out) * itemsize   # 2x = double buffering
    max_tc = budget_bytes // per_channel

    if max_tc >= C:
        tc = C
    elif max_tc >= sub:
        tc = (max_tc // sub) * sub                 # full-sublane multiple
        for cand in range(tc, sub - 1, -sub):      # prefer an even split of C
            if C % cand == 0:
                tc = cand
                break
    else:
        # Even one sublane group of channels exceeds the budget (very large L).
        # Do NOT over-budget by forcing tc up to `sub`.
        # TODO(synk): split the L rows across an extra "arbitrary" grid axis
        # (scalar-prefetched per-row-group output offsets) for this case.
        tc = max(1, int(max_tc))

    # Give the grid enough parallel steps (v7x has 2 TCs; also keeps the auto
    # pipeline busy).  Shrink only in full-sublane multiples (layout-safe).
    def steps(t):
        return B * ((C + t - 1) // t)

    while tc > sub and steps(tc) < target_steps:
        cand = max(sub, ((tc // 2 + sub - 1) // sub) * sub)
        if cand >= tc:
            cand = tc - sub
        if cand < sub:
            break
        tc = cand
    return tc


def _upper_tri_kernel(x_ref, o_ref, *, seq_len, diagonal_offset):
    # x_ref: (tc, L*L) flattened source tile; o_ref: (tc, N) compact output
    # tile for the same (batch, channel-tile).  Channels sit on sublanes in
    # both tiles, and all slice starts/sizes are static, so each copy lowers
    # to dense full-sublane vector loads, a single compiler-inserted
    # lane-phase rotate, and mostly-unmasked vector stores.
    L = seq_len
    off = 0
    row0 = 0

    # diagonal_offset <= 0: leading full-length rows are contiguous in both
    # the flattened source and the destination -> one merged copy.
    n_full = max(0, min(L, 1 - diagonal_offset))
    if n_full > 0:
        o_ref[:, pl.ds(0, n_full * L)] = x_ref[:, pl.ds(0, n_full * L)]
        off = n_full * L
        row0 = n_full

    # TODO(synk): for very large L (>~1024) group rows (lax.fori_loop with an
    # unrolled inner group, or an extra "arbitrary" grid axis with
    # scalar-prefetched output offsets) to bound unrolled code size, and skip
    # strictly-lower-triangular column blocks to remove the ~1.5x HBM read
    # amplification when bandwidth-bound.
    for i in range(row0, L):
        start = i + diagonal_offset            # > 0 for every row handled here
        n = L - start
        if n <= 0:
            break                              # remaining rows are empty
        o_ref[:, pl.ds(off, n)] = x_ref[:, pl.ds(i * L + start, n)]
        off += n


def upper_tri(x, diagonal_offset: int = 2, *, vmem_budget_bytes=None):
    # x: (batch, channel, seq_len, seq_len)  ->  (batch, channel, n_triu)
    B, C, L, L2 = x.shape
    assert L == L2, "UpperTri expects a square last-two-dims input"
    n_out = _num_triu(L, diagonal_offset)
    if n_out <= 0:
        raise ValueError("diagonal_offset leaves no upper-triangular elements")

    itemsize = jnp.dtype(x.dtype).itemsize
    phys_vmem = _vmem_capacity_bytes()
    if vmem_budget_bytes is None:
        # ~40% of physical VMEM for the double-buffered in+out tiles:
        # ~51 MiB on v5e/v6e (128 MiB), ~25 MiB on v7x (64 MiB).
        vmem_budget_bytes = int(0.4 * phys_vmem)

    tc = _choose_channel_tile(B, C, L, n_out, x.dtype, vmem_budget_bytes)
    num_ct = pl.cdiv(C, tc)

    # Scoped VMEM limit: must cover the double-buffered block plus headroom;
    # never capped below the actual requirement, bounded by physical VMEM.
    block_bytes = tc * (L * L + n_out) * itemsize
    vmem_limit = max(32 << 20, 2 * block_bytes + (4 << 20))
    vmem_limit = int(min(vmem_limit, phys_vmem - (2 << 20)))

    kernel = functools.partial(
        _upper_tri_kernel, seq_len=L, diagonal_offset=diagonal_offset
    )

    # Flatten the trailing (L, L) dims outside the kernel (free for a
    # contiguous array): keeps channels on sublanes for source and output.
    x_flat = x.reshape(B, C, L * L)

    return pl.pallas_call(
        kernel,
        out_shape=jax.ShapeDtypeStruct((B, C, n_out), x.dtype),
        grid_spec=pltpu.PrefetchScalarGridSpec(
            num_scalar_prefetch=0,
            grid=(B, num_ct),  # batch x channel-tile; both parallel
            in_specs=[
                pl.BlockSpec((None, tc, L * L), lambda b, c: (b, c, 0)),
            ],
            out_specs=pl.BlockSpec((None, tc, n_out), lambda b, c: (b, c, 0)),
        ),
        compiler_params=pltpu.CompilerParams(
            dimension_semantics=("parallel", "parallel"),
            vmem_limit_bytes=vmem_limit,
        ),
    )(x_flat)


def upper_tri_ref(x, diagonal_offset: int = 2):
    """Pure-JAX/numpy reference mirroring the PyTorch forward."""
    B, C, L, _ = x.shape
    rows, cols = np.triu_indices(L, k=diagonal_offset)
    flat_idx = rows * L + cols
    return x.reshape(B, C, L * L)[:, :, flat_idx]


if __name__ == "__main__":
    key = jax.random.PRNGKey(0)
    B, C, L = 2, 4, 16  # (batch, channel, seq, seq)
    x = jax.random.normal(key, (B, C, L, L), dtype=jnp.float32)

    out = jax.block_until_ready(upper_tri(x, diagonal_offset=2))

    ref = upper_tri_ref(x, diagonal_offset=2)
    assert out.shape == ref.shape == (B, C, (L - 2) * (L - 1) // 2)
    np.testing.assert_array_equal(np.asarray(out), np.asarray(ref))

    print("KERNEL_OK")
</pallas_src>

<mosaic_0001>
module attributes {stable_mosaic.version = 11 : i64} {
  func.func @_upper_tri_kernel(%arg0: i32, %arg1: i32, %arg2: memref<1x4x256xf32, #tpu.memory_space<vmem>>, %arg3: memref<1x4x105xf32, #tpu.memory_space<vmem>>) attributes {dimension_semantics = [#tpu.dimension_semantics<parallel>, #tpu.dimension_semantics<parallel>], iteration_bounds = array<i64: 2, 1>, scalar_prefetch = 0 : i64, scratch_operands = 0 : i64, tpu.core_type = #tpu.core_type<tc>, window_params = [{transform_indices = @transform_0, window_bounds = array<i64: 1, 4, 256>}, {transform_indices = @transform_1, window_bounds = array<i64: 1, 4, 105>}]} {
    %c0 = arith.constant 0 : index
    %c0_0 = arith.constant 0 : index
    %c2 = arith.constant 2 : index
    %0 = vector.load %arg2[%c0, %c0_0, %c2] : memref<1x4x256xf32, #tpu.memory_space<vmem>>, vector<1x4x14xf32>
    %1 = vector.shape_cast %0 : vector<1x4x14xf32> to vector<4x14xf32>
    %c0_1 = arith.constant 0 : index
    %c0_2 = arith.constant 0 : index
    %c0_3 = arith.constant 0 : index
    %2 = vector.load %arg3[%c0_1, %c0_2, %c0_3] : memref<1x4x105xf32, #tpu.memory_space<vmem>>, vector<1x4x14xf32>
    %3 = vector.shape_cast %2 : vector<1x4x14xf32> to vector<4x14xf32>
    %4 = vector.shape_cast %1 : vector<4x14xf32> to vector<1x4x14xf32>
    tpu.vector_store %arg3[%c0_1, %c0_2, %c0_3], %4 {strides = array<i32>} : memref<1x4x105xf32, #tpu.memory_space<vmem>>, vector<1x4x14xf32>,
    %c0_4 = arith.constant 0 : index
    %c0_5 = arith.constant 0 : index
    %c19 = arith.constant 19 : index
    %5 = vector.load %arg2[%c0_4, %c0_5, %c19] : memref<1x4x256xf32, #tpu.memory_space<vmem>>, vector<1x4x13xf32>
    %6 = vector.shape_cast %5 : vector<1x4x13xf32> to vector<4x13xf32>
    %c0_6 = arith.constant 0 : index
    %c0_7 = arith.constant 0 : index
    %c14 = arith.constant 14 : index
    %7 = vector.load %arg3[%c0_6, %c0_7, %c14] : memref<1x4x105xf32, #tpu.memory_space<vmem>>, vector<1x4x13xf32>
    %8 = vector.shape_cast %7 : vector<1x4x13xf32> to vector<4x13xf32>
    %9 = vector.shape_cast %6 : vector<4x13xf32> to vector<1x4x13xf32>
    tpu.vector_store %arg3[%c0_6, %c0_7, %c14], %9 {strides = array<i32>} : memref<1x4x105xf32, #tpu.memory_space<vmem>>, vector<1x4x13xf32>,
    %c0_8 = arith.constant 0 : index
    %c0_9 = arith.constant 0 : index
    %c36 = arith.constant 36 : index
    %10 = vector.load %arg2[%c0_8, %c0_9, %c36] : memref<1x4x256xf32, #tpu.memory_space<vmem>>, vector<1x4x12xf32>
    %11 = vector.shape_cast %10 : vector<1x4x12xf32> to vector<4x12xf32>
    %c0_10 = arith.constant 0 : index
    %c0_11 = arith.constant 0 : index
    %c27 = arith.constant 27 : index
    %12 = vector.load %arg3[%c0_10, %c0_11, %c27] : memref<1x4x105xf32, #tpu.memory_space<vmem>>, vector<1x4x12xf32>
    %13 = vector.shape_cast %12 : vector<1x4x12xf32> to vector<4x12xf32>
    %14 = vector.shape_cast %11 : vector<4x12xf32> to vector<1x4x12xf32>
    tpu.vector_store %arg3[%c0_10, %c0_11, %c27], %14 {strides = array<i32>} : memref<1x4x105xf32, #tpu.memory_space<vmem>>, vector<1x4x12xf32>,
    %c0_12 = arith.constant 0 : index
    %c0_13 = arith.constant 0 : index
    %c53 = arith.constant 53 : index
    %15 = vector.load %arg2[%c0_12, %c0_13, %c53] : memref<1x4x256xf32, #tpu.memory_space<vmem>>, vector<1x4x11xf32>
    %16 = vector.shape_cast %15 : vector<1x4x11xf32> to vector<4x11xf32>
    %c0_14 = arith.constant 0 : index
    %c0_15 = arith.constant 0 : index
    %c39 = arith.constant 39 : index
    %17 = vector.load %arg3[%c0_14, %c0_15, %c39] : memref<1x4x105xf32, #tpu.memory_space<vmem>>, vector<1x4x11xf32>
    %18 = vector.shape_cast %17 : vector<1x4x11xf32> to vector<4x11xf32>
    %19 = vector.shape_cast %16 : vector<4x11xf32> to vector<1x4x11xf32>
    tpu.vector_store %arg3[%c0_14, %c0_15, %c39], %19 {strides = array<i32>} : memref<1x4x105xf32, #tpu.memory_space<vmem>>, vector<1x4x11xf32>,
    %c0_16 = arith.constant 0 : index
    %c0_17 = arith.constant 0 : index
    %c70 = arith.constant 70 : index
    %20 = vector.load %arg2[%c0_16, %c0_17, %c70] : memref<1x4x256xf32, #tpu.memory_space<vmem>>, vector<1x4x10xf32>
    %21 = vector.shape_cast %20 : vector<1x4x10xf32> to vector<4x10xf32>
    %c0_18 = arith.constant 0 : index
    %c0_19 = arith.constant 0 : index
    %c50 = arith.constant 50 : index
    %22 = vector.load %arg3[%c0_18, %c0_19, %c50] : memref<1x4x105xf32, #tpu.memory_space<vmem>>, vector<1x4x10xf32>
    %23 = vector.shape_cast %22 : vector<1x4x10xf32> to vector<4x10xf32>
    %24 = vector.shape_cast %21 : vector<4x10xf32> to vector<1x4x10xf32>
    tpu.vector_store %arg3[%c0_18, %c0_19, %c50], %24 {strides = array<i32>} : memref<1x4x105xf32, #tpu.memory_space<vmem>>, vector<1x4x10xf32>,
    %c0_20 = arith.constant 0 : index
    %c0_21 = arith.constant 0 : index
    %c87 = arith.constant 87 : index
    %25 = vector.load %arg2[%c0_20, %c0_21, %c87] : memref<1x4x256xf32, #tpu.memory_space<vmem>>, vector<1x4x9xf32>
    %26 = vector.shape_cast %25 : vector<1x4x9xf32> to vector<4x9xf32>
    %c0_22 = arith.constant 0 : index
    %c0_23 = arith.constant 0 : index
    %c60 = arith.constant 60 : index
    %27 = vector.load %arg3[%c0_22, %c0_23, %c60] : memref<1x4x105xf32, #tpu.memory_space<vmem>>, vector<1x4x9xf32>
    %28 = vector.shape_cast %27 : vector<1x4x9xf32> to vector<4x9xf32>
    %29 = vector.shape_cast %26 : vector<4x9xf32> to vector<1x4x9xf32>
    tpu.vector_store %arg3[%c0_22, %c0_23, %c60], %29 {strides = array<i32>} : memref<1x4x105xf32, #tpu.memory_space<vmem>>, vector<1x4x9xf32>,
    %c0_24 = arith.constant 0 : index
    %c0_25 = arith.constant 0 : index
    %c104 = arith.constant 104 : index
    %30 = vector.load %arg2[%c0_24, %c0_25, %c104] : memref<1x4x256xf32, #tpu.memory_space<vmem>>, vector<1x4x8xf32>
    %31 = vector.shape_cast %30 : vector<1x4x8xf32> to vector<4x8xf32>
    %c0_26 = arith.constant 0 : index
    %c0_27 = arith.constant 0 : index
    %c69 = arith.constant 69 : index
    %32 = vector.load %arg3[%c0_26, %c0_27, %c69] : memref<1x4x105xf32, #tpu.memory_space<vmem>>, vector<1x4x8xf32>
    %33 = vector.shape_cast %32 : vector<1x4x8xf32> to vector<4x8xf32>
    %34 = vector.shape_cast %31 : vector<4x8xf32> to vector<1x4x8xf32>
    tpu.vector_store %arg3[%c0_26, %c0_27, %c69], %34 {strides = array<i32>} : memref<1x4x105xf32, #tpu.memory_space<vmem>>, vector<1x4x8xf32>,
    %c0_28 = arith.constant 0 : index
    %c0_29 = arith.constant 0 : index
    %c121 = arith.constant 121 : index
    %35 = vector.load %arg2[%c0_28, %c0_29, %c121] : memref<1x4x256xf32, #tpu.memory_space<vmem>>, vector<1x4x7xf32>
    %36 = vector.shape_cast %35 : vector<1x4x7xf32> to vector<4x7xf32>
    %c0_30 = arith.constant 0 : index
    %c0_31 = arith.constant 0 : index
    %c77 = arith.constant 77 : index
    %37 = vector.load %arg3[%c0_30, %c0_31, %c77] : memref<1x4x105xf32, #tpu.memory_space<vmem>>, vector<1x4x7xf32>
    %38 = vector.shape_cast %37 : vector<1x4x7xf32> to vector<4x7xf32>
    %39 = vector.shape_cast %36 : vector<4x7xf32> to vector<1x4x7xf32>
    tpu.vector_store %arg3[%c0_30, %c0_31, %c77], %39 {strides = array<i32>} : memref<1x4x105xf32, #tpu.memory_space<vmem>>, vector<1x4x7xf32>,
    %c0_32 = arith.constant 0 : index
    %c0_33 = arith.constant 0 : index
    %c138 = arith.constant 138 : index
    %40 = vector.load %arg2[%c0_32, %c0_33, %c138] : memref<1x4x256xf32, #tpu.memory_space<vmem>>, vector<1x4x6xf32>
    %41 = vector.shape_cast %40 : vector<1x4x6xf32> to vector<4x6xf32>
    %c0_34 = arith.constant 0 : index
    %c0_35 = arith.constant 0 : index
    %c84 = arith.constant 84 : index
    %42 = vector.load %arg3[%c0_34, %c0_35, %c84] : memref<1x4x105xf32, #tpu.memory_space<vmem>>, vector<1x4x6xf32>
    %43 = vector.shape_cast %42 : vector<1x4x6xf32> to vector<4x6xf32>
    %44 = vector.shape_cast %41 : vector<4x6xf32> to vector<1x4x6xf32>
    tpu.vector_store %arg3[%c0_34, %c0_35, %c84], %44 {strides = array<i32>} : memref<1x4x105xf32, #tpu.memory_space<vmem>>, vector<1x4x6xf32>,
    %c0_36 = arith.constant 0 : index
    %c0_37 = arith.constant 0 : index
    %c155 = arith.constant 155 : index
    %45 = vector.load %arg2[%c0_36, %c0_37, %c155] : memref<1x4x256xf32, #tpu.memory_space<vmem>>, vector<1x4x5xf32>
    %46 = vector.shape_cast %45 : vector<1x4x5xf32> to vector<4x5xf32>
    %c0_38 = arith.constant 0 : index
    %c0_39 = arith.constant 0 : index
    %c90 = arith.constant 90 : index
    %47 = vector.load %arg3[%c0_38, %c0_39, %c90] : memref<1x4x105xf32, #tpu.memory_space<vmem>>, vector<1x4x5xf32>
    %48 = vector.shape_cast %47 : vector<1x4x5xf32> to vector<4x5xf32>
    %49 = vector.shape_cast %46 : vector<4x5xf32> to vector<1x4x5xf32>
    tpu.vector_store %arg3[%c0_38, %c0_39, %c90], %49 {strides = array<i32>} : memref<1x4x105xf32, #tpu.memory_space<vmem>>, vector<1x4x5xf32>,
    %c0_40 = arith.constant 0 : index
    %c0_41 = arith.constant 0 : index
    %c172 = arith.constant 172 : index
    %50 = vector.load %arg2[%c0_40, %c0_41, %c172] : memref<1x4x256xf32, #tpu.memory_space<vmem>>, vector<1x4x4xf32>
    %51 = vector.shape_cast %50 : vector<1x4x4xf32> to vector<4x4xf32>
    %c0_42 = arith.constant 0 : index
    %c0_43 = arith.constant 0 : index
    %c95 = arith.constant 95 : index
    %52 = vector.load %arg3[%c0_42, %c0_43, %c95] : memref<1x4x105xf32, #tpu.memory_space<vmem>>, vector<1x4x4xf32>
    %53 = vector.shape_cast %52 : vector<1x4x4xf32> to vector<4x4xf32>
    %54 = vector.shape_cast %51 : vector<4x4xf32> to vector<1x4x4xf32>
    tpu.vector_store %arg3[%c0_42, %c0_43, %c95], %54 {strides = array<i32>} : memref<1x4x105xf32, #tpu.memory_space<vmem>>, vector<1x4x4xf32>,
    %c0_44 = arith.constant 0 : index
    %c0_45 = arith.constant 0 : index
    %c189 = arith.constant 189 : index
    %55 = vector.load %arg2[%c0_44, %c0_45, %c189] : memref<1x4x256xf32, #tpu.memory_space<vmem>>, vector<1x4x3xf32>
    %56 = vector.shape_cast %55 : vector<1x4x3xf32> to vector<4x3xf32>
    %c0_46 = arith.constant 0 : index
    %c0_47 = arith.constant 0 : index
    %c99 = arith.constant 99 : index
    %57 = vector.load %arg3[%c0_46, %c0_47, %c99] : memref<1x4x105xf32, #tpu.memory_space<vmem>>, vector<1x4x3xf32>
    %58 = vector.shape_cast %57 : vector<1x4x3xf32> to vector<4x3xf32>
    %59 = vector.shape_cast %56 : vector<4x3xf32> to vector<1x4x3xf32>
    tpu.vector_store %arg3[%c0_46, %c0_47, %c99], %59 {strides = array<i32>} : memref<1x4x105xf32, #tpu.memory_space<vmem>>, vector<1x4x3xf32>,
    %c0_48 = arith.constant 0 : index
    %c0_49 = arith.constant 0 : index
    %c206 = arith.constant 206 : index
    %60 = vector.load %arg2[%c0_48, %c0_49, %c206] : memref<1x4x256xf32, #tpu.memory_space<vmem>>, vector<1x4x2xf32>
    %61 = vector.shape_cast %60 : vector<1x4x2xf32> to vector<4x2xf32>
    %c0_50 = arith.constant 0 : index
    %c0_51 = arith.constant 0 : index
    %c102 = arith.constant 102 : index
    %62 = vector.load %arg3[%c0_50, %c0_51, %c102] : memref<1x4x105xf32, #tpu.memory_space<vmem>>, vector<1x4x2xf32>
    %63 = vector.shape_cast %62 : vector<1x4x2xf32> to vector<4x2xf32>
    %64 = vector.shape_cast %61 : vector<4x2xf32> to vector<1x4x2xf32>
    tpu.vector_store %arg3[%c0_50, %c0_51, %c102], %64 {strides = array<i32>} : memref<1x4x105xf32, #tpu.memory_space<vmem>>, vector<1x4x2xf32>,
    %c0_52 = arith.constant 0 : index
    %c0_53 = arith.constant 0 : index
    %c223 = arith.constant 223 : index
    %65 = vector.load %arg2[%c0_52, %c0_53, %c223] : memref<1x4x256xf32, #tpu.memory_space<vmem>>, vector<1x4x1xf32>
    %66 = vector.shape_cast %65 : vector<1x4x1xf32> to vector<4x1xf32>
    %c0_54 = arith.constant 0 : index
    %c0_55 = arith.constant 0 : index
    %c104_56 = arith.constant 104 : index
    %67 = vector.load %arg3[%c0_54, %c0_55, %c104_56] : memref<1x4x105xf32, #tpu.memory_space<vmem>>, vector<1x4x1xf32>
    %68 = vector.shape_cast %67 : vector<1x4x1xf32> to vector<4x1xf32>
    %69 = vector.shape_cast %66 : vector<4x1xf32> to vector<1x4x1xf32>
    tpu.vector_store %arg3[%c0_54, %c0_55, %c104_56], %69 {strides = array<i32>} : memref<1x4x105xf32, #tpu.memory_space<vmem>>, vector<1x4x1xf32>,
    return
  }
  func.func @transform_0(%arg0: i32, %arg1: i32) -> (i32, i32, i32) {
    %c0_i32 = arith.constant 0 : i32
    %c0_i32_0 = arith.constant 0 : i32
    return %arg0, %arg1, %c0_i32 : i32, i32, i32
  }
  func.func @transform_1(%arg0: i32, %arg1: i32) -> (i32, i32, i32) {
    %c0_i32 = arith.constant 0 : i32
    %c0_i32_0 = arith.constant 0 : i32
    return %arg0, %arg1, %c0_i32 : i32, i32, i32
  }
}

</mosaic_0001>

<llo_original>
// kernel: tpu_custom_call.1
$region0: #{tpu_custom_call.1}
  #allocation0 [shape = 'u32[]', space=smem, size = 0x4, offset = 0x4, fixed_abs, tag = 'smem constant byte address 0x4 - core index']
  #allocation1 [shape = 'u32[144,128]{1,0:T(1,128)}', space=vmem, size = 0x12000, scoped, tag = 'internal scratch']
  %s0 = inlined_call_operand.hbm [shape: f32[2,4,256], index: 0, kind: input, shape index: {}]
  %s1 = inlined_call_operand.hbm [shape: f32[2,4,105], index: 1, kind: output, shape index: {}]
  %s2 = sld [smem:[#allocation0]]
  $region41: #{tpu_custom_call.1} parent=0
    _
  %s4 = ssub.s32 1, %s2
  %s5 = scalar_select 0, %s4, %s2
  $region1: #{tpu_custom_call.1} parent=0
    #allocation2 [shape = 'u8[8192]{0}', space=vmem, size = 0x2000, scoped, tag = 'input window, operand 0']
    #allocation3 [shape = 's32[2]{0}', space=sflag, size = 0x8, scoped, tag = 'scoped memory for tpu_custom_call.1']
    #allocation4 [shape = 's32[2]{0}', space=sflag, size = 0x8, scoped, tag = 'scoped memory for tpu_custom_call.1']
    #allocation5 [shape = 'u8[4096]{0}', space=vmem, size = 0x1000, scoped, tag = 'output window, operand 0']
    %6 = vsyncpa [#allocation3], 0
    %s7 = scalar_lea.sflag [#allocation3], 1
    %8 = vsyncpa %s7, 0
    %9 = vsyncpa [#allocation4], 0
    %s10 = scalar_lea.sflag [#allocation4], 1
    %11 = vsyncpa %s10, 0
    loop: start=0, step=1, limit=4
    $region2: #{tpu_custom_call.1} parent=1 // loop_pre_header
      _
    $region3: #{tpu_custom_call.1} parent=1 // loop_header
      %s13 = sphi 0, %s17
      %p14 = scmp.ge.s32.totalorder %s13, 4
      %s20 = sphi 0, %s32
      %s21 = sphi 0, %s28
      %s22 = sphi 0, %s20
      %s23 = sphi 0, %s21
      %s24 = sphi 0, %s22
      %s25 = sphi 0, %s23
      %s37 = sphi 0, %s39
      %s40 = sphi 0, %s37
      %s41 = sphi 0, %s40
      %s57 = sphi 0, %s41
      %s65 = sphi 0, %s67
      %s68 = sphi 0, %s65
      %s69 = sphi 0, %s68
      %s85 = sphi 0, %s69
    $region4: #{tpu_custom_call.1} parent=1 // loop_header_branch
      %16 = sbr.rel (%p14) target = $region8
    $region5: #{tpu_custom_call.1} parent=1 // loop_body
      %s18 = ssub.s32 %s13, 1
      %s19 = ssub.s32 %s13, 2
      %s26 = sadd.s32 1, %s21
      %p27 = scmp.ge.s32.totalorder %s26, 1
      %s28 = scalar_select %p27, 0, %s26
      %s29 = sadd.s32 1, %s20
      %s30 = scalar_select %p27, %s29, %s20
      %p31 = scmp.ge.s32.totalorder %s30, 2
      %s32 = scalar_select %p31, 0, %s30
      %s33 = ssub.s32 %s20, %s32
      %s34 = ssub.s32 %s21, %s28
      %s35 = sor.u32 %s33, %s34
      %p36 = scmp.eq.s32.totalorder %s35, 0
      %s38 = sadd.s32 %s37, 1
      %s39 = scalar_select %p36, %s37, %s38
      %p42 = pneg %p36
      %p43 = scmp.eq.s32.totalorder %s13, 1
      %p44 = por %p42, %p43
      %p45 = scmp.ne.s32.totalorder %s37, %s40
      %p46 = scmp.eq.s32.totalorder %s13, 0
      %p47 = por %p45, %p46
      %p48 = scmp.ne.s32.totalorder %s37, %s40
      %p49 = scmp.eq.s32.totalorder %s18, 1
      %p50 = por %p48, %p49
      %p51 = scmp.ne.s32.totalorder %s40, %s41
      %p52 = scmp.eq.s32.totalorder %s18, 0
      %p53 = por %p51, %p52
      %p54 = scmp.ne.s32.totalorder %s40, %s41
      %p55 = scmp.eq.s32.totalorder %s19, 1
      %p56 = por %p54, %p55
      %p58 = scmp.ne.s32.totalorder %s41, %s57
      %p59 = scmp.eq.s32.totalorder %s19, 0
      %p60 = por %p58, %p59
      %s61 = ssub.s32 %s20, %s32
      %s62 = ssub.s32 %s21, %s28
      %s63 = sor.u32 %s61, %s62
      %p64 = scmp.eq.s32.totalorder %s63, 0
      %s66 = sadd.s32 %s65, 1
      %s67 = scalar_select %p64, %s65, %s66
      %p70 = pneg %p64
      %p71 = scmp.eq.s32.totalorder %s13, 1
      %p72 = por %p70, %p71
      %p73 = scmp.ne.s32.totalorder %s65, %s68
      %p74 = scmp.eq.s32.totalorder %s13, 0
      %p75 = por %p73, %p74
      %p76 = scmp.ne.s32.totalorder %s65, %s68
      %p77 = scmp.eq.s32.totalorder %s18, 1
      %p78 = por %p76, %p77
      %p79 = scmp.ne.s32.totalorder %s68, %s69
      %p80 = scmp.eq.s32.totalorder %s18, 0
      %p81 = por %p79, %p80
      %p82 = scmp.ne.s32.totalorder %s68, %s69
      %p83 = scmp.eq.s32.totalorder %s19, 1
      %p84 = por %p82, %p83
      %p86 = scmp.ne.s32.totalorder %s69, %s85
      %p87 = scmp.eq.s32.totalorder %s19, 0
      %p88 = por %p86, %p87
      %p89 = scmp.le.s32.totalorder 1, %s13
      %p90 = scmp.lt.s32.totalorder %s13, 3
      %p91 = pnand %p89, %p90
      %p92 = pneg %p91
      // Predicated region
      $region9: #{tpu_custom_call.1} parent=5 // pred_check
        _
      $region10: #{tpu_custom_call.1} parent=5 // pred_check_branch
        %94 = sbr.rel (%p91) target = $region12
      $region11: #{tpu_custom_call.1} parent=5 // pred_region
        %s95 = ssub.s32 %s13, 1
      $region12: #{tpu_custom_call.1} parent=5 // pred_fallthru
        _
      %p96 = scmp.lt.s32.totalorder %s13, 2
      // Predicated region
      $region13: #{tpu_custom_call.1} parent=5 // pred_check
        %p97 = pneg %p96
      $region14: #{tpu_custom_call.1} parent=5 // pred_check_branch
        %99 = sbr.rel (%p97) target = $region16
      $region15: #{tpu_custom_call.1} parent=5 // pred_region
        // Predicated region
        $region17: #{tpu_custom_call.1} parent=15 // pred_check
          %p100 = pneg %p47
        $region18: #{tpu_custom_call.1} parent=15 // pred_check_branch
          %102 = sbr.rel (%p100) target = $region20
        $region19: #{tpu_custom_call.1} parent=15 // pred_region
          %s103 = sand.u32 %s37, 1
          %s104 = scalar_lea.sflag [#allocation3], %s103
          %s105 = sand.u32 %s37, 1
          %s106 = smul.addr %s105, 8
          %s107 = scalar_lea.vmem [#allocation2], %s106
          %s109 = ssub.s32 128, 128
          %110 = vsyncadd %s104, %s109
          %s111 = smul.addr %s21, 2
          %s112 = smul.addr %s20, 2
          %s113 = sadd.s32 %s111, %s112
          %s114 = smul.addr %s113, 64
          %s115 = scalar_lea.hbm %s0, %s114
          %s117 = sshll.u32 %s107, 4
          %s118 = int_to_ptr.vmem [resolvable:$true] %s117
          %120 = dma.hbm_to_vmem [thread:$0]  %s115, 128, %s118, %s104
        $region20: #{tpu_custom_call.1} parent=15 // pred_fallthru
          _
      $region16: #{tpu_custom_call.1} parent=5 // pred_fallthru
        _
      %p121 = scmp.le.s32.totalorder 1, %s13
      %p122 = scmp.lt.s32.totalorder %s13, 3
      %p123 = pnand %p121, %p122
      %p124 = pneg %p123
      // Predicated region
      $region21: #{tpu_custom_call.1} parent=5 // pred_check
        _
      $region22: #{tpu_custom_call.1} parent=5 // pred_check_branch
        %126 = sbr.rel (%p123) target = $region24
      $region23: #{tpu_custom_call.1} parent=5 // pred_region
        %s127 = ssub.s32 %s13, 1
        %s128 = sand.u32 %s40, 1
        %s129 = scalar_lea.sflag [#allocation3], %s128
        %s130 = sand.u32 %s40, 1
        %s131 = smul.addr %s130, 8
        %s132 = scalar_lea.vmem [#allocation2], %s131
        // Predicated region
        $region25: #{tpu_custom_call.1} parent=23 // pred_check
          %p133 = pneg %p53
        $region26: #{tpu_custom_call.1} parent=23 // pred_check_branch
          %135 = sbr.rel (%p133) target = $region28
        $region27: #{tpu_custom_call.1} parent=23 // pred_region
          %136 = dma.done %s129, 128
        $region28: #{tpu_custom_call.1} parent=23 // pred_fallthru
          _
        %s137 = sand.u32 %s40, 1
        %s138 = scalar_lea.sflag [#allocation3], %s137
        %s139 = sand.u32 %s40, 1
        %s140 = smul.addr %s139, 8
        %s141 = scalar_lea.vmem [#allocation2], %s140
        %p142 = pneg %p53
        %p143 = pneg %p50
        %p144 = pneg %p81
        %p145 = pneg %p78
        %s146 = sand.u32 %s68, 1
        %s147 = scalar_lea.sflag [#allocation4], %s146
        %s148 = sand.u32 %s68, 1
        %s149 = smul.addr %s148, 4
        %s150 = scalar_lea.vmem [#allocation5], %s149
        %v151 = vld [vmem:[%s132] sm:$0xf]
        %153 = vrot.lane.b32.xlu0 %v151, 126
        %v154 = vpop.permute.xlu0 %153
        %vm156 = vcmask 109568
        %157 = vst.msk [vmem:[%s150] sm:$0xf] %vm156, %v154
        %v158 = vld [vmem:[%s132] sm:$0xf]
        %160 = vrot.lane.b32.xlu0 %v158, 123
        %v161 = vpop.permute.xlu0 %160
        %vm163 = vcmask 216176
        %164 = vst.msk [vmem:[%s150] sm:$0xf] %vm163, %v161
        %v165 = vld [vmem:[%s132] sm:$0xf]
        %167 = vrot.lane.b32.xlu0 %v165, 119
        %v168 = vpop.permute.xlu0 %167
        %vm170 = vcmask 314584
        %171 = vst.msk [vmem:[%s150] sm:$0xf] %vm170, %v168
        %v172 = vld [vmem:[%s132] sm:$0xf]
        %174 = vrot.lane.b32.xlu0 %v172, 114
        %v175 = vpop.permute.xlu0 %174
        %vm177 = vcmask 404792
        %178 = vst.msk [vmem:[%s150] sm:$0xf] %vm177, %v175
        %v179 = vld [vmem:[%s132] sm:$0xf]
        %181 = vrot.lane.b32.xlu0 %v179, 108
        %v182 = vpop.permute.xlu0 %181
        %vm184 = vcmask 486800
        %185 = vst.msk [vmem:[%s150] sm:$0xf] %vm184, %v182
        %v186 = vld [vmem:[%s132] sm:$0xf]
        %188 = vrot.lane.b32.xlu0 %v186, 101
        %v189 = vpop.permute.xlu0 %188
        %vm191 = vcmask 560608
        %192 = vst.msk [vmem:[%s150] sm:$0xf] %vm191, %v189
        %v193 = vld [vmem:[%s132] sm:$0xf]
        %195 = vrot.lane.b32.xlu0 %v193, 93
        %v196 = vpop.permute.xlu0 %195
        %vm198 = vcmask 626216
        %199 = vst.msk [vmem:[%s150] sm:$0xf] %vm198, %v196
        %v200 = vld [vmem:[%s132] sm:$0xf]
        %202 = vrot.lane.b32.xlu0 %v200, 84
        %v203 = vpop.permute.xlu0 %202
        %vm205 = vcmask 683624
        %206 = vst.msk [vmem:[%s150] sm:$0xf] %vm205, %v203
        %v207 = vld [vmem:[%s132 + $0x4] sm:$0xf]
        %209 = vrot.lane.b32.xlu0 %v207, 74
        %v210 = vpop.permute.xlu0 %209
        %vm212 = vcmask 732832
        %213 = vst.msk [vmem:[%s150] sm:$0xf] %vm212, %v210
        %v214 = vld [vmem:[%s132 + $0x4] sm:$0xf]
        %216 = vrot.lane.b32.xlu0 %v214, 63
        %v217 = vpop.permute.xlu0 %216
        %vm219 = vcmask 773840
        %220 = vst.msk [vmem:[%s150] sm:$0xf] %vm219, %v217
        %v221 = vld [vmem:[%s132 + $0x4] sm:$0xf]
        %223 = vrot.lane.b32.xlu0 %v221, 51
        %v224 = vpop.permute.xlu0 %223
        %vm226 = vcmask 806648
        %227 = vst.msk [vmem:[%s150] sm:$0xf] %vm226, %v224
        %v228 = vld [vmem:[%s132 + $0x4] sm:$0xf]
        %230 = vrot.lane.b32.xlu0 %v228, 38
        %v231 = vpop.permute.xlu0 %230
        %vm233 = vcmask 831256
        %234 = vst.msk [vmem:[%s150] sm:$0xf] %vm233, %v231
        %v235 = vld [vmem:[%s132 + $0x4] sm:$0xf]
        %237 = vrot.lane.b32.xlu0 %v235, 24
        %v238 = vpop.permute.xlu0 %237
        %vm240 = vcmask 847664
        %241 = vst.msk [vmem:[%s150] sm:$0xf] %vm240, %v238
        %v242 = vld [vmem:[%s132 + $0x4] sm:$0xf]
        %244 = vrot.lane.b32.xlu0 %v242, 9
        %v245 = vpop.permute.xlu0 %244
        %vm247 = vcmask 855872
        %248 = vst.msk [vmem:[%s150] sm:$0xf] %vm247, %v245
        %s249 = sand.u32 %s68, 1
        %s250 = scalar_lea.sflag [#allocation4], %s249
        %s251 = sand.u32 %s68, 1
        %s252 = smul.addr %s251, 4
        %s253 = scalar_lea.vmem [#allocation5], %s252
        // Predicated region
        $region29: #{tpu_custom_call.1} parent=23 // pred_check
          %p254 = pneg %p78
        $region30: #{tpu_custom_call.1} parent=23 // pred_check_branch
          %256 = sbr.rel (%p254) target = $region32
        $region31: #{tpu_custom_call.1} parent=23 // pred_region
          %s258 = ssub.s32 64, 64
          %259 = vsyncadd %s250, %s258
          %s260 = sadd.s32 %s23, %s22
          %s261 = smul.addr %s260, 64
          %s262 = scalar_lea.hbm %s1, %s261
          %s264 = sshll.u32 %s253, 4
          %s265 = int_to_ptr.vmem [resolvable:$true] %s264
          %267 = dma.vmem_to_hbm [thread:$0]  %s265, 64, %s262, %s250
        $region32: #{tpu_custom_call.1} parent=23 // pred_fallthru
          _
      $region24: #{tpu_custom_call.1} parent=5 // pred_fallthru
        _
      %p268 = scmp.le.s32.totalorder 2, %s13
      // Predicated region
      $region33: #{tpu_custom_call.1} parent=5 // pred_check
        %p269 = pneg %p268
      $region34: #{tpu_custom_call.1} parent=5 // pred_check_branch
        %271 = sbr.rel (%p269) target = $region36
      $region35: #{tpu_custom_call.1} parent=5 // pred_region
        %s272 = ssub.s32 %s13, 2
        // Predicated region
        $region37: #{tpu_custom_call.1} parent=35 // pred_check
          %p273 = pneg %p84
        $region38: #{tpu_custom_call.1} parent=35 // pred_check_branch
          %275 = sbr.rel (%p273) target = $region40
        $region39: #{tpu_custom_call.1} parent=35 // pred_region
          %s276 = sand.u32 %s69, 1
          %s277 = scalar_lea.sflag [#allocation4], %s276
          %s278 = sand.u32 %s69, 1
          %s279 = smul.addr %s278, 4
          %s280 = scalar_lea.vmem [#allocation5], %s279
          %281 = dma.done %s277, 64
        $region40: #{tpu_custom_call.1} parent=35 // pred_fallthru
          _
      $region36: #{tpu_custom_call.1} parent=5 // pred_fallthru
        _
    $region6: #{tpu_custom_call.1} parent=1 // loop_footer
      %s17 = sadd.s32 1, %s13
    $region7: #{tpu_custom_call.1} parent=1 // loop_footer_branch
      %12 = sbr.rel target = $region3
    $region8: #{tpu_custom_call.1} parent=1 // loop_exit
      _
    %282 = vsyncpa [#allocation3], 1
    %s283 = scalar_lea.sflag [#allocation3], 1
    %284 = vsyncpa %s283, 1
    %285 = vsyncpa [#allocation4], 1
    %s286 = scalar_lea.sflag [#allocation4], 1
    %287 = vsyncpa %s286, 1

</llo_original>
